<compile_context>
chip_gen: v7x
topology: tpu7x:2x2x1
jax: 0.10.0
libtpu: 0.0.40
codegen_flags: <defaults>
</compile_context>

<pallas_src>
import math

import jax
import jax.numpy as jnp
from jax import lax
from jax.experimental import pallas as pl
from jax.experimental.pallas import tpu as pltpu

_LN_10000 = math.log(10000.0)


def _make_pe_add_kernel(model_depth, flat):
    """Build the kernel: o = x + PE(tile), PE generated on the fly.

    flat=False: blocks are (B, tile_s, D); row == position, lane == column.
    flat=True : blocks are (B, tile_r, 128) over a lane-dense view of (S, D)
                (requires D | 128); position/column come from shift/mask math.
    """
    neg_ln_over_d = -(_LN_10000 / model_depth)
    if flat:
        per_row = 128 // model_depth              # positions per 128-lane row
        log2_d = model_depth.bit_length() - 1     # D is a power of two here

    def kernel(x_ref, o_ref):
        _, tr, lanes = x_ref.shape
        r0 = pl.program_id(0) * tr
        row = lax.broadcasted_iota(jnp.int32, (tr, lanes), 0) + r0
        lane = lax.broadcasted_iota(jnp.int32, (tr, lanes), 1)
        if flat:
            pos = (row * per_row + (lane >> log2_d)).astype(jnp.float32)
            col = lane & (model_depth - 1)
        else:
            pos = row.astype(jnp.float32)         # exact for pos < 2**24
            col = lane
        col_even = ((col >> 1).astype(jnp.float32) * 2.0)
        arg = pos * jnp.exp(col_even * neg_ln_over_d)
        pe = jnp.where((col & 1) == 0, jnp.sin(arg), jnp.cos(arg))
        # Broadcast the (tile, lanes) PE tile over the batch dim of the block.
        o_ref[...] = x_ref[...] + pe.astype(x_ref.dtype)[None, :, :]

    return kernel


def _vmem_capacity_bytes(default=64 * 1024 * 1024):
    # Conservative default = v7x's 64 MiB per TC; v5e/v6e report 128 MiB.
    try:
        cap = getattr(pltpu.get_tpu_info(), "vmem_capacity_bytes", None)
        if cap:
            return int(cap)
    except Exception:
        pass
    return default


def _choose_tile_rows(n_rows, batch, lanes, itemsize, vmem_budget_bytes):
    """Row tile sized by bytes: big enough to saturate HBM (~4 MiB x block),
    small enough that double-buffered in/out blocks + PE temps fit VMEM."""
    align = 8 * max(1, 4 // itemsize)          # f32: 8, bf16: 16, int8/fp8: 32
    # 2x-buffered x block + 2x-buffered out block + f32 PE temp + cast result.
    bytes_per_row = lanes * (2 * 2 * batch * itemsize + 4 + itemsize)
    max_rows = max(align, vmem_budget_bytes // bytes_per_row)
    target_rows = max(align, (4 * 1024 * 1024) // max(1, batch * lanes * itemsize))
    tile = min(n_rows, target_rows, max_rows)
    if tile < n_rows:
        tile = max(align, (tile // align) * align)
    elif n_rows >= 2 * align:
        # Whole array fits in one tile: split so the single "parallel" grid
        # axis gives both v7x TensorCores work (negligible cost on 1-TC chips).
        half = -(-n_rows // 2)
        half = -(-half // align) * align
        if half < n_rows:
            tile = half
    return tile


def positional_encoding_forward(x, *, donate_x=False):
    """x: (B, S, D) float array. Returns x + pe[None, :S, :]."""
    B, S, D = x.shape
    itemsize = jnp.dtype(x.dtype).itemsize

    vmem_cap = _vmem_capacity_bytes()
    vmem_budget = vmem_cap // 2
    vmem_limit = (vmem_cap * 3) // 4

    # Lane-dense view when D is a small divisor of 128 and the flatten is
    # clean; avoids masked partial stores on the lane axis for tiny D.
    flat = (D < 128) and (128 % D == 0) and (S % (128 // D) == 0)
    if flat:
        lanes = 128
        n_rows = (S * D) // 128
        x_view = x.reshape(B, n_rows, lanes)
    else:
        lanes = D
        n_rows = S
        x_view = x

    tile = _choose_tile_rows(n_rows, B, lanes, itemsize, vmem_budget)
    grid = (pl.cdiv(n_rows, tile),)

    out = pl.pallas_call(
        _make_pe_add_kernel(D, flat),
        out_shape=jax.ShapeDtypeStruct((B, n_rows, lanes), x.dtype),
        grid_spec=pltpu.PrefetchScalarGridSpec(
            num_scalar_prefetch=0,
            grid=grid,
            in_specs=[pl.BlockSpec((B, tile, lanes), lambda i: (0, i, 0))],
            out_specs=pl.BlockSpec((B, tile, lanes), lambda i: (0, i, 0)),
        ),
        compiler_params=pltpu.CompilerParams(
            dimension_semantics=("parallel",),
            vmem_limit_bytes=vmem_limit,
        ),
        input_output_aliases=({0: 0} if donate_x else {}),
    )(x_view)

    return out.reshape(B, S, D) if flat else out


def _reference_pe(S, D, dtype=jnp.float32):
    # Pure-JAX reference matching the PyTorch __init__ buffer construction.
    position = jnp.arange(0.0, S, dtype=jnp.float32)[:, None]            # (S, 1)
    div_term = jnp.exp(jnp.arange(0.0, D, 2, dtype=jnp.float32)
                       * (-(_LN_10000 / D)))                             # (D/2,)
    pe = jnp.zeros((S, D), dtype=jnp.float32)
    pe = pe.at[:, 0::2].set(jnp.sin(position * div_term))
    pe = pe.at[:, 1::2].set(jnp.cos(position * div_term))
    return pe.astype(dtype)


if __name__ == "__main__":
    key = jax.random.PRNGKey(0)

    # --- small shape consistent with the module (batch=2, seq=8, depth=32);
    #     D=32 < 128 exercises the lane-dense (flat) path ---
    B, S, D = 2, 8, 32
    x = jax.random.normal(key, (B, S, D), dtype=jnp.float32)
    out = jax.block_until_ready(positional_encoding_forward(x))
    ref = x + _reference_pe(S, D)[None, :, :]
    assert out.shape == (B, S, D)
    assert out.dtype == x.dtype
    assert jnp.allclose(out, ref, atol=1e-5, rtol=1e-5), "mismatch (flat path)"

    # --- larger shape: D multiple of 128 -> standard path; exercises the
    #     sequence tiling / parallel-axis split and the position offsets ---
    B2, S2, D2 = 2, 1024, 256
    x2 = jax.random.normal(jax.random.PRNGKey(1), (B2, S2, D2), dtype=jnp.float32)
    out2 = jax.block_until_ready(positional_encoding_forward(x2))
    ref2 = x2 + _reference_pe(S2, D2)[None, :, :]
    # Slightly looser tolerance: hardware sin/cos at large arguments may differ
    # from XLA's by ~1e-5..1e-4; a tiling/offset bug would give O(1) errors.
    assert jnp.allclose(out2, ref2, atol=1e-3, rtol=1e-3), "mismatch (tiled path)"

    print("KERNEL_OK")
</pallas_src>

<mosaic_0001>
module attributes {stable_mosaic.version = 11 : i64} {
  func.func @kernel(%arg0: i32, %arg1: memref<2x2x128xf32, #tpu.memory_space<vmem>>, %arg2: memref<2x2x128xf32, #tpu.memory_space<vmem>>) attributes {dimension_semantics = [#tpu.dimension_semantics<parallel>], iteration_bounds = array<i64: 1>, scalar_prefetch = 0 : i64, scratch_operands = 0 : i64, tpu.core_type = #tpu.core_type<tc>, window_params = [{transform_indices = @transform_0, window_bounds = array<i64: 2, 2, 128>}, {transform_indices = @transform_1, window_bounds = array<i64: 2, 2, 128>}]} {
    %c2_i32 = arith.constant 2 : i32
    %0 = arith.muli %arg0, %c2_i32 : i32
    %1 = tpu.iota {dimensions = array<i32: 0>} : vector<2x128xi32>
    %2 = vector.broadcast %0 : i32 to vector<2x128xi32>
    %3 = arith.addi %1, %2 : vector<2x128xi32>
    %4 = tpu.iota {dimensions = array<i32: 1>} : vector<2x128xi32>
    %c4_i32 = arith.constant 4 : i32
    %5 = vector.broadcast %c4_i32 : i32 to vector<2x128xi32>
    %6 = arith.muli %3, %5 : vector<2x128xi32>
    %c5_i32 = arith.constant 5 : i32
    %7 = vector.broadcast %c5_i32 : i32 to vector<2x128xi32>
    %8 = arith.shrsi %4, %7 : vector<2x128xi32>
    %9 = arith.addi %6, %8 : vector<2x128xi32>
    %10 = arith.sitofp %9 : vector<2x128xi32> to vector<2x128xf32>
    %c31_i32 = arith.constant 31 : i32
    %11 = vector.broadcast %c31_i32 : i32 to vector<2x128xi32>
    %12 = arith.andi %4, %11 : vector<2x128xi32>
    %c1_i32 = arith.constant 1 : i32
    %13 = vector.broadcast %c1_i32 : i32 to vector<2x128xi32>
    %14 = arith.shrsi %12, %13 : vector<2x128xi32>
    %15 = arith.sitofp %14 : vector<2x128xi32> to vector<2x128xf32>
    %cst = arith.constant 2.000000e+00 : f32
    %16 = vector.broadcast %cst : f32 to vector<2x128xf32>
    %17 = arith.mulf %15, %16 : vector<2x128xf32>
    %cst_0 = arith.constant -0.287823141 : f32
    %18 = vector.broadcast %cst_0 : f32 to vector<2x128xf32>
    %19 = arith.mulf %17, %18 : vector<2x128xf32>
    %20 = math.exp %19 : vector<2x128xf32>
    %21 = arith.mulf %10, %20 : vector<2x128xf32>
    %c1_i32_1 = arith.constant 1 : i32
    %22 = vector.broadcast %c1_i32_1 : i32 to vector<2x128xi32>
    %23 = arith.andi %12, %22 : vector<2x128xi32>
    %c0_i32 = arith.constant 0 : i32
    %24 = vector.broadcast %c0_i32 : i32 to vector<2x128xi32>
    %25 = arith.cmpi eq, %23, %24 : vector<2x128xi32>
    %26 = math.sin %21 : vector<2x128xf32>
    %27 = math.cos %21 : vector<2x128xf32>
    %28 = arith.select %25, %26, %27 : vector<2x128xi1>, vector<2x128xf32>
    %c0 = arith.constant 0 : index
    %c0_2 = arith.constant 0 : index
    %c0_3 = arith.constant 0 : index
    %29 = vector.load %arg1[%c0, %c0_2, %c0_3] : memref<2x2x128xf32, #tpu.memory_space<vmem>>, vector<2x2x128xf32>
    %30 = vector.shape_cast %28 : vector<2x128xf32> to vector<1x2x128xf32>
    %31 = vector.broadcast %30 : vector<1x2x128xf32> to vector<2x2x128xf32>
    %32 = arith.addf %29, %31 : vector<2x2x128xf32>
    %c0_4 = arith.constant 0 : index
    %c0_5 = arith.constant 0 : index
    %c0_6 = arith.constant 0 : index
    %33 = vector.load %arg2[%c0_4, %c0_5, %c0_6] : memref<2x2x128xf32, #tpu.memory_space<vmem>>, vector<2x2x128xf32>
    tpu.vector_store %arg2[%c0_4, %c0_5, %c0_6], %32 {strides = array<i32>} : memref<2x2x128xf32, #tpu.memory_space<vmem>>, vector<2x2x128xf32>,
    return
  }
  func.func @transform_0(%arg0: i32) -> (i32, i32, i32) {
    %c0_i32 = arith.constant 0 : i32
    %c0_i32_0 = arith.constant 0 : i32
    %c0_i32_1 = arith.constant 0 : i32
    return %c0_i32, %arg0, %c0_i32_0 : i32, i32, i32
  }
  func.func @transform_1(%arg0: i32) -> (i32, i32, i32) {
    %c0_i32 = arith.constant 0 : i32
    %c0_i32_0 = arith.constant 0 : i32
    %c0_i32_1 = arith.constant 0 : i32
    return %c0_i32, %arg0, %c0_i32_0 : i32, i32, i32
  }
}

</mosaic_0001>

<llo_original>
// kernel: tpu_custom_call.1
$region0: #{tpu_custom_call.1}
  #allocation0 [shape = 'u32[]', space=smem, size = 0x4, offset = 0x4, fixed_abs, tag = 'smem constant byte address 0x4 - core index']
  #allocation1 [shape = 'u32[144,128]{1,0:T(1,128)}', space=vmem, size = 0x12000, scoped, tag = 'internal scratch']
  %s0 = inlined_call_operand.hbm [shape: f32[2,2,128], index: 0, kind: input, shape index: {}]
  %s1 = inlined_call_operand.hbm [shape: f32[2,2,128], index: 1, kind: output, shape index: {}]
  %s2 = sld [smem:[#allocation0]]
  $region18: #{tpu_custom_call.1} parent=0
    _
  %s4 = ssub.s32 1, %s2
  %s5 = scalar_select 0, %s4, %s2
  $region1: #{tpu_custom_call.1} parent=0
    #allocation2 [shape = 'u8[2048]{0}', space=vmem, size = 0x800, scoped, tag = 'input window, operand 0, single buffered']
    #allocation3 [shape = 's32[1]{0}', space=sflag, size = 0x4, scoped, tag = 'scoped memory for tpu_custom_call.1']
    #allocation4 [shape = 's32[1]{0}', space=sflag, size = 0x4, scoped, tag = 'scoped memory for tpu_custom_call.1']
    #allocation5 [shape = 'u8[2048]{0}', space=vmem, size = 0x800, scoped, tag = 'output window, operand 0, single buffered']
    %6 = vsyncpa [#allocation3], 0
    %7 = vsyncpa [#allocation4], 0
    // Predicated region
    $region2: #{tpu_custom_call.1} parent=1 // pred_check
      _
    $region3: #{tpu_custom_call.1} parent=1 // pred_check_branch
      %9 = sbr.rel (0) target = $region5
    $region4: #{tpu_custom_call.1} parent=1 // pred_region
      %s11 = ssub.s32 64, 64
      %12 = vsyncadd [#allocation3], %s11
      %s13 = sshll.u32 [#allocation2], 4
      %s14 = int_to_ptr.vmem [resolvable:$true] %s13
      %19 = dma.hbm_to_vmem [thread:$0]  %s0, 64, %s14, [#allocation3], 32, 32, 2
    $region5: #{tpu_custom_call.1} parent=1 // pred_fallthru
      _
    // Predicated region
    $region6: #{tpu_custom_call.1} parent=1 // pred_check
      _
    $region7: #{tpu_custom_call.1} parent=1 // pred_check_branch
      %21 = sbr.rel (0) target = $region9
    $region8: #{tpu_custom_call.1} parent=1 // pred_region
      %22 = dma.done [#allocation3], 64
    $region9: #{tpu_custom_call.1} parent=1 // pred_fallthru
      _
    %s23 = smul.u32 0, 2
    %v24 = vlaneseq
    %v25 = vshrl.u32 %v24, 7
    %v26 = vstv %s23
    %v27 = vadd.s32 %v25, %v26
    %v28 = vlaneseq
    %v29 = vand.u32 %v28, 127
    %v30 = vmul.u32 %v27, 4
    %v31 = vshra.s32 %v29, 5
    %v32 = vadd.s32 %v30, %v31
    %v33 = vcvt.s32.f32 %v32
    %v34 = vand.u32 %v29, 31
    %v35 = vshra.s32 %v34, 1
    %v36 = vcvt.s32.f32 %v35
    %v37 = vmul.f32 %v36, 2.0
    %v38 = vmul.f32 %v37, -0.28782314
    %v39 = vmul.f32 %v38, 1.442695
    %v40 = vpow.pop %v39
    %v41 = vmul.f32 %v33, %v40
    %v42 = vand.u32 %v34, 1
    %vm43 = vcmp.eq.s32.totalorder %v42, 0
    %v44 = vand.u32 2147483647, %v41
    %vm45 = vcmp.le.f32.partialorder %v44, 0.7853982
    %vm46 = vcmp.lt.s32.totalorder %v41, 0
    %v47 = vand.u32 %v41, 2139095040
    %v48 = vshrl.u32 %v47, 23
    %v49 = vsub.s32 %v48, 127
    %v50 = vand.u32 2147483647, %v41
    %v51 = vand.u32 %v50, 8388607
    %v52 = vor.u32 %v51, 8388608
    %v53 = vsub.s32 0, %v52
    %v54 = vadd.s32 %v49, 1
    %vm55 = vcmp.gt.s32.totalorder %v54, 0
    %v56 = vsel %vm55, %v54, 0
    %v57 = vshrl.u32 %v56, 5
    %v58 = vand.u32 %v56, 31
    %v59 = vsub.s32 32, %v58
    %v60 = vshrl.u32 683565275, %v59
    %v61 = vshll.u32 683565275, %v58
    %v62 = vshrl.u32 2475754826, %v59
    %v63 = vor.u32 %v61, %v62
    %v64 = vshll.u32 2475754826, %v58
    %v65 = vshrl.u32 2131351028, %v59
    %v66 = vor.u32 %v64, %v65
    %v67 = vshll.u32 2131351028, %v58
    %v68 = vshrl.u32 2102212464, %v59
    %v69 = vor.u32 %v67, %v68
    %v70 = vshll.u32 2102212464, %v58
    %v71 = vshrl.u32 920167782, %v59
    %v72 = vor.u32 %v70, %v71
    %v73 = vshll.u32 920167782, %v58
    %v74 = vshrl.u32 1326507024, %v59
    %v75 = vor.u32 %v73, %v74
    %vm76 = vcmp.lt.s32.totalorder %v57, 1
    %vm77 = vcmp.lt.s32.totalorder %v57, 2
    %vm78 = vcmp.lt.s32.totalorder %v57, 3
    %vm79 = vcmp.lt.s32.totalorder %v57, 4
    %v80 = vsel %vm76, %v60, %v63
    %v81 = vsel %vm79, %v69, 2102212464
    %v82 = vsel %vm78, %v66, %v81
    %v83 = vsel %vm77, %v80, %v82
    %v84 = vsel %vm76, %v63, %v66
    %v85 = vsel %vm79, %v72, 920167782
    %v86 = vsel %vm78, %v69, %v85
    %v87 = vsel %vm77, %v84, %v86
    %v88 = vsel %vm76, %v66, %v69
    %v89 = vsel %vm79, %v75, 1326507024
    %v90 = vsel %vm78, %v72, %v89
    %v91 = vsel %vm77, %v88, %v90
    %v92 = vshll.u32 %v52, 8
    %v93 = vmul.u32.u64.compose %v92, %v91
    %v94 = vextract.low.u32 %v93
    %v95 = vextract.high.u32 %v93
    %v96 = vmul.u32.u64.compose %v92, %v87
    %v97 = vextract.low.u32 %v96
    %v98 = vextract.high.u32 %v96
    %v99 = vmul.u32 %v92, %v83
    %v100 = vadd.s32 %v95, %v97
    %vm101 = vc.u32 %v95, %v97
    %v102 = vadd.s32 %v98, 1
    %v103 = vsel %vm101, %v102, %v98
    %v104 = vadd.s32 %v99, %v103
    %v105 = vadd.s32 %v104, 536870912
    %v106 = vshrl.u32 %v105, 30
    %v107 = vshll.u32 %v106, 30
    %v108 = vsub.s32 %v104, %v107
    %vm109 = vcmp.lt.s32.totalorder %v108, 0
    %v110 = vsub.s32 0, %v108
    %v111 = vsel %vm109, %v110, %v108
    %v112 = vclz %v111
    %v113 = vsub.s32 %v112, 2
    %vm114 = vcmp.gt.s32.totalorder 0, %v113
    %v115 = vsel %vm114, 0, %v113
    %v116 = vsub.s32 32, %v115
    %v117 = vshll.u32 %v108, %v115
    %v118 = vshrl.u32 %v100, %v116
    %v119 = vor.u32 %v117, %v118
    %v120 = vsub.s32 4294967266, %v115
    %v121 = vadd.s32 %v120, 127
    %v122 = vshll.u32 %v121, 23
    %v123 = vor.u32 4788187, %v122
    %v124 = vand.u32 2147483647, %v123
    %v126 = vcvt.s32.f32 %v119
    %v127 = vmul.f32 %v126, %v124
    %v128 = vxor.u32 %v127, 2147483648
    %v129 = vsel %vm46, %v128, %v127
    %v130 = vsub.s32 4, %v106
    %v131 = vsel %vm46, %v130, %v106
    %v132 = vsel %vm45, %v41, %v129
    %v133 = vsel %vm45, 0, %v131
    %v134 = vcosq.f32.pop %v132
    %v135 = vsinq.f32.pop %v132
    %vm136 = vweird.f32 %v41
    %v137 = vadd.s32 %v133, 3
    %v138 = vand.u32 %v137, 3
    %vm139 = vcmp.lt.s32.totalorder %v138, 2
    %vm140 = vcmp.eq.s32.totalorder %v138, 0
    %v141 = vxor.u32 %v135, 2147483648
    %v142 = vsel %vm140, %v134, %v141
    %vm143 = vcmp.eq.s32.totalorder %v138, 2
    %v144 = vxor.u32 %v134, 2147483648
    %v145 = vsel %vm143, %v144, %v135
    %v146 = vsel %vm139, %v142, %v145
    %v147 = vsel %vm136, nan, %v146
    %v148 = vand.u32 2147483647, %v41
    %vm149 = vcmp.le.f32.partialorder %v148, 0.7853982
    %vm150 = vcmp.lt.s32.totalorder %v41, 0
    %v151 = vand.u32 %v41, 2139095040
    %v152 = vshrl.u32 %v151, 23
    %v153 = vsub.s32 %v152, 127
    %v154 = vand.u32 2147483647, %v41
    %v155 = vand.u32 %v154, 8388607
    %v156 = vor.u32 %v155, 8388608
    %v157 = vsub.s32 0, %v156
    %v158 = vadd.s32 %v153, 1
    %vm159 = vcmp.gt.s32.totalorder %v158, 0
    %v160 = vsel %vm159, %v158, 0
    %v161 = vshrl.u32 %v160, 5
    %v162 = vand.u32 %v160, 31
    %v163 = vsub.s32 32, %v162
    %v164 = vshrl.u32 683565275, %v163
    %v165 = vshll.u32 683565275, %v162
    %v166 = vshrl.u32 2475754826, %v163
    %v167 = vor.u32 %v165, %v166
    %v168 = vshll.u32 2475754826, %v162
    %v169 = vshrl.u32 2131351028, %v163
    %v170 = vor.u32 %v168, %v169
    %v171 = vshll.u32 2131351028, %v162
    %v172 = vshrl.u32 2102212464, %v163
    %v173 = vor.u32 %v171, %v172
    %v174 = vshll.u32 2102212464, %v162
    %v175 = vshrl.u32 920167782, %v163
    %v176 = vor.u32 %v174, %v175
    %v177 = vshll.u32 920167782, %v162
    %v178 = vshrl.u32 1326507024, %v163
    %v179 = vor.u32 %v177, %v178
    %vm180 = vcmp.lt.s32.totalorder %v161, 1
    %vm181 = vcmp.lt.s32.totalorder %v161, 2
    %vm182 = vcmp.lt.s32.totalorder %v161, 3
    %vm183 = vcmp.lt.s32.totalorder %v161, 4
    %v184 = vsel %vm180, %v164, %v167
    %v185 = vsel %vm183, %v173, 2102212464
    %v186 = vsel %vm182, %v170, %v185
    %v187 = vsel %vm181, %v184, %v186
    %v188 = vsel %vm180, %v167, %v170
    %v189 = vsel %vm183, %v176, 920167782
    %v190 = vsel %vm182, %v173, %v189
    %v191 = vsel %vm181, %v188, %v190
    %v192 = vsel %vm180, %v170, %v173
    %v193 = vsel %vm183, %v179, 1326507024
    %v194 = vsel %vm182, %v176, %v193
    %v195 = vsel %vm181, %v192, %v194
    %v196 = vshll.u32 %v156, 8
    %v197 = vmul.u32.u64.compose %v196, %v195
    %v198 = vextract.low.u32 %v197
    %v199 = vextract.high.u32 %v197
    %v200 = vmul.u32.u64.compose %v196, %v191
    %v201 = vextract.low.u32 %v200
    %v202 = vextract.high.u32 %v200
    %v203 = vmul.u32 %v196, %v187
    %v204 = vadd.s32 %v199, %v201
    %vm205 = vc.u32 %v199, %v201
    %v206 = vadd.s32 %v202, 1
    %v207 = vsel %vm205, %v206, %v202
    %v208 = vadd.s32 %v203, %v207
    %v209 = vadd.s32 %v208, 536870912
    %v210 = vshrl.u32 %v209, 30
    %v211 = vshll.u32 %v210, 30
    %v212 = vsub.s32 %v208, %v211
    %vm213 = vcmp.lt.s32.totalorder %v212, 0
    %v214 = vsub.s32 0, %v212
    %v215 = vsel %vm213, %v214, %v212
    %v216 = vclz %v215
    %v217 = vsub.s32 %v216, 2
    %vm218 = vcmp.gt.s32.totalorder 0, %v217
    %v219 = vsel %vm218, 0, %v217
    %v220 = vsub.s32 32, %v219
    %v221 = vshll.u32 %v212, %v219
    %v222 = vshrl.u32 %v204, %v220
    %v223 = vor.u32 %v221, %v222
    %v224 = vsub.s32 4294967266, %v219
    %v225 = vadd.s32 %v224, 127
    %v226 = vshll.u32 %v225, 23
    %v227 = vor.u32 4788187, %v226
    %v228 = vand.u32 2147483647, %v227
    %v230 = vcvt.s32.f32 %v223
    %v231 = vmul.f32 %v230, %v228
    %v232 = vxor.u32 %v231, 2147483648
    %v233 = vsel %vm150, %v232, %v231
    %v234 = vsub.s32 4, %v210
    %v235 = vsel %vm150, %v234, %v210
    %v236 = vsel %vm149, %v41, %v233
    %v237 = vsel %vm149, 0, %v235
    %v238 = vcosq.f32.pop %v236
    %v239 = vsinq.f32.pop %v236
    %vm240 = vweird.f32 %v41
    %v241 = vand.u32 %v237, 3
    %vm242 = vcmp.lt.s32.totalorder %v241, 2
    %vm243 = vcmp.eq.s32.totalorder %v241, 0
    %v244 = vxor.u32 %v239, 2147483648
    %v245 = vsel %vm243, %v238, %v244
    %vm246 = vcmp.eq.s32.totalorder %v241, 2
    %v247 = vxor.u32 %v238, 2147483648
    %v248 = vsel %vm246, %v247, %v239
    %v249 = vsel %vm242, %v245, %v248
    %v250 = vsel %vm240, nan, %v249
    %v251 = vsel %vm43, %v147, %v250
    %v252 = vld [vmem:[#allocation2] sm:$0x3]
    %v253 = vld [vmem:[#allocation2 + $0x2] sm:$0x3]
    %v254 = vadd.f32 %v252, %v251
    %v255 = vadd.f32 %v253, %v251
    %256 = vst [vmem:[#allocation5] sm:$0x3] %v254
    %257 = vst [vmem:[#allocation5 + $0x2] sm:$0x3] %v255
    // Predicated region
    $region10: #{tpu_custom_call.1} parent=1 // pred_check
      _
    $region11: #{tpu_custom_call.1} parent=1 // pred_check_branch
      %259 = sbr.rel (0) target = $region13
    $region12: #{tpu_custom_call.1} parent=1 // pred_region
      %s261 = ssub.s32 64, 64
      %262 = vsyncadd [#allocation4], %s261
      %s263 = sshll.u32 [#allocation5], 4
      %s264 = int_to_ptr.vmem [resolvable:$true] %s263
      %269 = dma.vmem_to_hbm [thread:$0]  %s264, 64, %s1, [#allocation4], 32, 32, 2
    $region13: #{tpu_custom_call.1} parent=1 // pred_fallthru
      _
    // Predicated region
    $region14: #{tpu_custom_call.1} parent=1 // pred_check
      _
    $region15: #{tpu_custom_call.1} parent=1 // pred_check_branch
      %271 = sbr.rel (0) target = $region17
    $region16: #{tpu_custom_call.1} parent=1 // pred_region
      %272 = dma.done [#allocation4], 64
    $region17: #{tpu_custom_call.1} parent=1 // pred_fallthru
      _
    %273 = vsyncpa [#allocation3], 1
    %274 = vsyncpa [#allocation4], 1

</llo_original>
